<compile_context>
chip_gen: v5e
topology: v5e:2x2
jax: 0.10.0
libtpu: 0.0.40
codegen_flags: <defaults>
</compile_context>

<pallas_src>
import math
from functools import partial

import jax
import jax.numpy as jnp
from jax.experimental import pallas as pl
from jax.experimental.pallas import tpu as pltpu


def _vmem_capacity_bytes():
    try:
        info = pltpu.get_tpu_info()
        cap = getattr(info, "vmem_capacity_bytes", None)
        if cap:
            return int(cap)
    except Exception:
        pass
    return 64 * 1024 * 1024        # conservative fallback (v7x per-TC)


_VMEM_CAP = _vmem_capacity_bytes()
_BIG_VMEM = _VMEM_CAP >= 100 * 1024 * 1024                    # v5e / v6e
_VMEM_LIMIT = min(int(_VMEM_CAP * 3 // 4), 100 * 1024 * 1024)  # 96 MiB / 48 MiB
_MAX_LANES_CONV = 16384 if _BIG_VMEM else 8192
_MAX_LANES_SOFTMAX = 65536 if _BIG_VMEM else 32768


def _pick_row_tile(h, w, max_lanes):
    """Output-image rows per grid step (spatial tile = th*w lanes)."""
    if h * w <= max_lanes:
        return h
    for th in range(h, 0, -1):
        if h % th == 0 and th * w <= max_lanes and (th * w) % 128 == 0:
            return th
    return h


@partial(jax.jit, static_argnames=("kernel_size", "group", "eps"))
def downsample_pasa_group_softmax(x, conv_w, gamma, beta, *, kernel_size, group,
                                  eps=1e-5):
    """x: (N, Cin, H, W) f32 NCHW.  conv_w: (Cout, Cin, k, k) PyTorch OIHW.
    Returns sigma of shape (N, group, 1, k*k, H*W) in bf16."""
    n, cin, h, w = x.shape
    k = kernel_size
    pad = k // 2
    cout = group * k * k
    h_pad = h + 2 * pad
    hw = h * w

    ck = cin * k
    ckp = -(-ck // 16) * 16          # pad channel rows to bf16 sublane packing

    # ---- glue (no HBM im2col): reflection pad + k column-shifted bf16 views ----
    # xs[b, c*k + dj, hp*w + j] = xp[b, c, hp, dj + j]; rows ck..ckp-1 are zero.
    # (These ops fuse into one XLA pass over x; the k row shifts are taken
    #  in-kernel as lane slices, so xs is only ~k*x bytes in bf16.)
    xp = jnp.pad(x, ((0, 0), (0, 0), (pad, pad), (pad, pad)), mode="reflect")
    xs = jnp.stack([xp[:, :, :, dj:dj + w] for dj in range(k)], axis=2)
    xs = xs.reshape(n, ck, h_pad * w)
    if ckp > ck:
        xs = jnp.pad(xs, ((0, 0), (0, ckp - ck), (0, 0)))
    xs = xs.astype(jnp.bfloat16)

    # w_flat[o, di*ckp + c*k + dj] = conv_w[o, c, di, dj]; padded cols are zero.
    wm = conv_w.transpose(0, 2, 1, 3).reshape(cout, k, ck)
    if ckp > ck:
        wm = jnp.pad(wm, ((0, 0), (0, 0), (0, ckp - ck)))
    wm = wm.reshape(cout, k * ckp).astype(jnp.bfloat16)

    th1 = _pick_row_tile(h, w, _MAX_LANES_CONV)   # conv rows per grid step
    ht1 = h // th1
    ts1 = th1 * w                                 # conv spatial (lane) tile

    # ---- kernel 1: conv (single merged dot) + per-tile batch-stat partials -----
    def conv_stats_kernel(xs_ref, w_ref, y_ref, ssum_ref, ssq_ref, stage_ref):
        # Stage the k row-shifted slices into one sublane-aligned RHS.
        # (Source lane starts are row-aligned, not 128-aligned; the lane shift
        #  happens on these vld/vst copies instead of on the MXU feed path.)
        if ht1 == 1:
            for di in range(k):
                stage_ref[di * ckp:(di + 1) * ckp, :] = \
                    xs_ref[0, :, pl.ds(di * w, ts1)]
        else:
            t = pl.program_id(1)
            for di in range(k):
                start = (t * th1 + di) * w
                stage_ref[di * ckp:(di + 1) * ckp, :] = \
                    xs_ref[0, :, pl.ds(start, ts1)]

        acc = jnp.dot(w_ref[...], stage_ref[...],
                      preferred_element_type=jnp.float32)      # (Cout, ts1) f32
        y_ref[0] = acc.astype(y_ref.dtype)                     # lane-dense bf16

        # Batch-stat partials via XLU cross-lane reductions (no VALU add loop).
        ssum_ref[0, 0] = jnp.sum(acc, axis=-1, keepdims=True)         # (Cout, 1)
        ssq_ref[0, 0] = jnp.sum(acc * acc, axis=-1, keepdims=True)    # (Cout, 1)

    flops1 = 2 * n * hw * cout * k * ckp
    bytes1 = int(xs.size * 2 + wm.size * 2 + n * cout * hw * 2
                 + 2 * n * ht1 * cout * 4)
    y, psum, psq = pl.pallas_call(
        conv_stats_kernel,
        out_shape=(jax.ShapeDtypeStruct((n, cout, hw), jnp.bfloat16),
                   jax.ShapeDtypeStruct((n, ht1, cout, 1), jnp.float32),
                   jax.ShapeDtypeStruct((n, ht1, cout, 1), jnp.float32)),
        grid_spec=pltpu.PrefetchScalarGridSpec(
            num_scalar_prefetch=0,
            grid=(n, ht1),
            in_specs=[pl.BlockSpec((1, ckp, h_pad * w), lambda b, t: (b, 0, 0)),
                      pl.BlockSpec((cout, k * ckp), lambda b, t: (0, 0))],
            out_specs=[pl.BlockSpec((1, cout, ts1), lambda b, t: (b, 0, t)),
                       pl.BlockSpec((1, 1, cout, 1), lambda b, t: (b, t, 0, 0)),
                       pl.BlockSpec((1, 1, cout, 1), lambda b, t: (b, t, 0, 0))],
            scratch_shapes=[pltpu.VMEM((k * ckp, ts1), jnp.bfloat16)]),
        compiler_params=pltpu.CompilerParams(
            # No cross-step carry -> both axes parallel (v7x megacore covers
            # n == 1 / odd n via the spatial axis too).
            dimension_semantics=("parallel", "parallel"),
            vmem_limit_bytes=_VMEM_LIMIT),
        cost_estimate=pl.CostEstimate(flops=flops1, transcendentals=0,
                                      bytes_accessed=bytes1),
    )(xs, wm)

    # ---- finalize BatchNorm (training-mode batch stats, biased variance) -------
    # NOTE: var = E[x^2] - E[x]^2 in f32; fine for kaiming/zero-mean conv output.
    m_total = n * hw
    s = jnp.sum(psum[..., 0], axis=(0, 1))
    sq = jnp.sum(psq[..., 0], axis=(0, 1))
    mean = s / m_total
    var = sq / m_total - mean * mean
    inv = jax.lax.rsqrt(var + eps)
    scale = gamma.astype(jnp.float32) * inv
    shift = beta.astype(jnp.float32) - mean * scale
    bn = jnp.stack([scale, shift], axis=1)          # (Cout, 2): folded BN params

    # ---- kernel 2: folded BN affine + softmax over the channel (sublane) axis --
    # Tiled independently of kernel 1 with the largest lane-dense block; bf16
    # output cuts its HBM write traffic 2x (softmax values live in [0, 1]).
    th2 = _pick_row_tile(h, w, _MAX_LANES_SOFTMAX)
    ht2 = h // th2
    ts2 = th2 * w

    def bn_softmax_kernel(y_ref, bn_ref, o_ref):
        z = y_ref[0].astype(jnp.float32) * bn_ref[:, 0:1] + bn_ref[:, 1:2]
        z = z - jnp.max(z, axis=0, keepdims=True)
        e = jnp.exp(z)
        r = pl.reciprocal(jnp.sum(e, axis=0, keepdims=True), approx=True)
        o_ref[0] = (e * r).astype(o_ref.dtype)

    flops2 = 6 * n * cout * hw
    bytes2 = int(n * cout * hw * (2 + 2) + cout * 2 * 4)
    sm = pl.pallas_call(
        bn_softmax_kernel,
        out_shape=jax.ShapeDtypeStruct((n, cout, hw), jnp.bfloat16),
        grid_spec=pltpu.PrefetchScalarGridSpec(
            num_scalar_prefetch=0,
            grid=(n, ht2),
            in_specs=[pl.BlockSpec((1, cout, ts2), lambda b, t: (b, 0, t)),
                      pl.BlockSpec((cout, 2), lambda b, t: (0, 0))],
            out_specs=pl.BlockSpec((1, cout, ts2), lambda b, t: (b, 0, t))),
        compiler_params=pltpu.CompilerParams(
            dimension_semantics=("parallel", "parallel"),
            vmem_limit_bytes=_VMEM_LIMIT),
        cost_estimate=pl.CostEstimate(flops=flops2, transcendentals=n * cout * hw,
                                      bytes_accessed=bytes2),
    )(y, bn)

    # ---- channel-major layout: final rearrangement is a pure reshape -----------
    return sm.reshape(n, group, k * k, hw)[:, :, None, :, :]


def _reference(x, conv_w, gamma, beta, *, kernel_size, group, eps=1e-5):
    """Pure-JAX f32 reference mirroring the PyTorch forward."""
    n, cin, h, w = x.shape
    k = kernel_size
    pad = k // 2
    cout = group * k * k
    xp = jnp.pad(x, ((0, 0), (0, 0), (pad, pad), (pad, pad)), mode="reflect")
    sigma = jax.lax.conv_general_dilated(
        xp, conv_w, window_strides=(1, 1), padding="VALID",
        dimension_numbers=("NCHW", "OIHW", "NCHW"))
    mean = jnp.mean(sigma, axis=(0, 2, 3), keepdims=True)
    var = jnp.mean((sigma - mean) ** 2, axis=(0, 2, 3), keepdims=True)
    sigma = (sigma - mean) / jnp.sqrt(var + eps)
    sigma = sigma * gamma.reshape(1, cout, 1, 1) + beta.reshape(1, cout, 1, 1)
    sigma = jax.nn.softmax(sigma, axis=1)
    h_out, w_out = sigma.shape[2], sigma.shape[3]
    return sigma.reshape(n, group, k * k, h_out * w_out)[:, :, None, :, :]


if __name__ == "__main__":
    # small shapes consistent with the module
    N, Cin, H, W = 2, 4, 16, 16
    kernel_size, group = 3, 2   # module's `stride` is unused by this forward (it returns sigma)
    Cout = group * kernel_size * kernel_size

    key = jax.random.PRNGKey(0)
    kx, kw = jax.random.split(key)
    x = jax.random.normal(kx, (N, Cin, H, W), dtype=jnp.float32)

    # deterministic kaiming_normal_(mode='fan_out', nonlinearity='relu')
    fan_out = Cout * kernel_size * kernel_size
    std = math.sqrt(2.0 / fan_out)
    conv_w = std * jax.random.normal(kw, (Cout, Cin, kernel_size, kernel_size),
                                     dtype=jnp.float32)
    gamma = jnp.ones((Cout,), dtype=jnp.float32)   # BatchNorm default affine init
    beta = jnp.zeros((Cout,), dtype=jnp.float32)

    out = downsample_pasa_group_softmax(x, conv_w, gamma, beta,
                                        kernel_size=kernel_size, group=group)
    out = jax.block_until_ready(out)

    ref = _reference(x, conv_w, gamma, beta, kernel_size=kernel_size, group=group)
    assert out.shape == (N, group, 1, kernel_size * kernel_size, H * W), out.shape
    err = float(jnp.max(jnp.abs(out.astype(jnp.float32) - ref)))
    # bf16 conv inputs / intermediate y / bf16 softmax output + approx reciprocal
    # vs f32 reference
    assert err < 3e-2, err
    print("KERNEL_OK")
</pallas_src>

<mosaic_0001>
module attributes {stable_mosaic.version = 11 : i64} {
  func.func @conv_stats_kernel(%arg0: i32, %arg1: i32, %arg2: memref<1x16x288xbf16, #tpu.memory_space<vmem>>, %arg3: memref<18x48xbf16, #tpu.memory_space<vmem>>, %arg4: memref<1x18x256xbf16, #tpu.memory_space<vmem>>, %arg5: memref<1x1x18x1xf32, #tpu.memory_space<vmem>>, %arg6: memref<1x1x18x1xf32, #tpu.memory_space<vmem>>, %arg7: memref<48x256xbf16, #tpu.memory_space<vmem>>) attributes {dimension_semantics = [#tpu.dimension_semantics<parallel>, #tpu.dimension_semantics<parallel>], iteration_bounds = array<i64: 2, 1>, scalar_prefetch = 0 : i64, scratch_operands = 1 : i64, tpu.core_type = #tpu.core_type<tc>, window_params = [{transform_indices = @transform_0, window_bounds = array<i64: 1, 16, 288>}, {pipeline_mode = #tpu.pipeline_mode<synchronous>, transform_indices = @transform_1, window_bounds = array<i64: 18, 48>}, {transform_indices = @transform_2, window_bounds = array<i64: 1, 18, 256>}, {transform_indices = @transform_3, window_bounds = array<i64: 1, 1, 18, 1>}, {transform_indices = @transform_4, window_bounds = array<i64: 1, 1, 18, 1>}]} {
    %c0 = arith.constant 0 : index
    %c0_0 = arith.constant 0 : index
    %c0_1 = arith.constant 0 : index
    %0 = vector.load %arg2[%c0, %c0_0, %c0_1] : memref<1x16x288xbf16, #tpu.memory_space<vmem>>, vector<1x16x256xbf16>
    %1 = vector.shape_cast %0 : vector<1x16x256xbf16> to vector<16x256xbf16>
    %c0_2 = arith.constant 0 : index
    %c0_3 = arith.constant 0 : index
    %2 = vector.load %arg7[%c0_2, %c0_3] : memref<48x256xbf16, #tpu.memory_space<vmem>>, vector<16x256xbf16>
    tpu.vector_store %arg7[%c0_2, %c0_3], %1 {strides = array<i32>} : memref<48x256xbf16, #tpu.memory_space<vmem>>, vector<16x256xbf16>,
    %c0_4 = arith.constant 0 : index
    %c0_5 = arith.constant 0 : index
    %c16 = arith.constant 16 : index
    %3 = vector.load %arg2[%c0_4, %c0_5, %c16] : memref<1x16x288xbf16, #tpu.memory_space<vmem>>, vector<1x16x256xbf16>
    %4 = vector.shape_cast %3 : vector<1x16x256xbf16> to vector<16x256xbf16>
    %c16_6 = arith.constant 16 : index
    %c0_7 = arith.constant 0 : index
    %5 = vector.load %arg7[%c16_6, %c0_7] : memref<48x256xbf16, #tpu.memory_space<vmem>>, vector<16x256xbf16>
    tpu.vector_store %arg7[%c16_6, %c0_7], %4 {strides = array<i32>} : memref<48x256xbf16, #tpu.memory_space<vmem>>, vector<16x256xbf16>,
    %c0_8 = arith.constant 0 : index
    %c0_9 = arith.constant 0 : index
    %c32 = arith.constant 32 : index
    %6 = vector.load %arg2[%c0_8, %c0_9, %c32] : memref<1x16x288xbf16, #tpu.memory_space<vmem>>, vector<1x16x256xbf16>
    %7 = vector.shape_cast %6 : vector<1x16x256xbf16> to vector<16x256xbf16>
    %c32_10 = arith.constant 32 : index
    %c0_11 = arith.constant 0 : index
    %8 = vector.load %arg7[%c32_10, %c0_11] : memref<48x256xbf16, #tpu.memory_space<vmem>>, vector<16x256xbf16>
    tpu.vector_store %arg7[%c32_10, %c0_11], %7 {strides = array<i32>} : memref<48x256xbf16, #tpu.memory_space<vmem>>, vector<16x256xbf16>,
    %c0_12 = arith.constant 0 : index
    %c0_13 = arith.constant 0 : index
    %9 = vector.load %arg3[%c0_12, %c0_13] : memref<18x48xbf16, #tpu.memory_space<vmem>>, vector<18x48xbf16>
    %c0_14 = arith.constant 0 : index
    %c0_15 = arith.constant 0 : index
    %10 = vector.load %arg7[%c0_14, %c0_15] : memref<48x256xbf16, #tpu.memory_space<vmem>>, vector<48x256xbf16>
    %cst = arith.constant dense<0.000000e+00> : vector<18x256xf32>
    %11 = tpu.matmul %9, %10, %cst {dimension_numbers = #tpu.dot_dimension_numbers<[1], [0], [0], [1], [0, 0, 1, 1], [], []>} : vector<18x48xbf16>, vector<48x256xbf16>, vector<18x256xf32> -> vector<18x256xf32>
    %12 = arith.truncf %11 : vector<18x256xf32> to vector<18x256xbf16>
    %c0_16 = arith.constant 0 : index
    %c0_17 = arith.constant 0 : index
    %c0_18 = arith.constant 0 : index
    %13 = vector.load %arg4[%c0_16, %c0_17, %c0_18] : memref<1x18x256xbf16, #tpu.memory_space<vmem>>, vector<1x18x256xbf16>
    %14 = vector.shape_cast %13 : vector<1x18x256xbf16> to vector<18x256xbf16>
    %15 = vector.shape_cast %12 : vector<18x256xbf16> to vector<1x18x256xbf16>
    tpu.vector_store %arg4[%c0_16, %c0_17, %c0_18], %15 {strides = array<i32>} : memref<1x18x256xbf16, #tpu.memory_space<vmem>>, vector<1x18x256xbf16>,
    %cst_19 = arith.constant dense<0.000000e+00> : vector<18xf32>
    %16 = vector.multi_reduction <add>, %11, %cst_19 [1] : vector<18x256xf32> to vector<18xf32>
    %17 = vector.shape_cast %16 : vector<18xf32> to vector<18x1xf32>
    %c0_20 = arith.constant 0 : index
    %c0_21 = arith.constant 0 : index
    %c0_22 = arith.constant 0 : index
    %c0_23 = arith.constant 0 : index
    %18 = vector.load %arg5[%c0_20, %c0_21, %c0_22, %c0_23] : memref<1x1x18x1xf32, #tpu.memory_space<vmem>>, vector<1x1x18x1xf32>
    %19 = vector.shape_cast %18 : vector<1x1x18x1xf32> to vector<18x1xf32>
    %20 = vector.shape_cast %17 : vector<18x1xf32> to vector<1x1x18x1xf32>
    tpu.vector_store %arg5[%c0_20, %c0_21, %c0_22, %c0_23], %20 {strides = array<i32>} : memref<1x1x18x1xf32, #tpu.memory_space<vmem>>, vector<1x1x18x1xf32>,
    %21 = arith.mulf %11, %11 : vector<18x256xf32>
    %cst_24 = arith.constant dense<0.000000e+00> : vector<18xf32>
    %22 = vector.multi_reduction <add>, %21, %cst_24 [1] : vector<18x256xf32> to vector<18xf32>
    %23 = vector.shape_cast %22 : vector<18xf32> to vector<18x1xf32>
    %c0_25 = arith.constant 0 : index
    %c0_26 = arith.constant 0 : index
    %c0_27 = arith.constant 0 : index
    %c0_28 = arith.constant 0 : index
    %24 = vector.load %arg6[%c0_25, %c0_26, %c0_27, %c0_28] : memref<1x1x18x1xf32, #tpu.memory_space<vmem>>, vector<1x1x18x1xf32>
    %25 = vector.shape_cast %24 : vector<1x1x18x1xf32> to vector<18x1xf32>
    %26 = vector.shape_cast %23 : vector<18x1xf32> to vector<1x1x18x1xf32>
    tpu.vector_store %arg6[%c0_25, %c0_26, %c0_27, %c0_28], %26 {strides = array<i32>} : memref<1x1x18x1xf32, #tpu.memory_space<vmem>>, vector<1x1x18x1xf32>,
    return
  }
  func.func @transform_0(%arg0: i32, %arg1: i32) -> (i32, i32, i32) {
    %c0_i32 = arith.constant 0 : i32
    %c0_i32_0 = arith.constant 0 : i32
    %c0_i32_1 = arith.constant 0 : i32
    return %arg0, %c0_i32, %c0_i32_0 : i32, i32, i32
  }
  func.func @transform_1(%arg0: i32, %arg1: i32) -> (i32, i32) {
    %c0_i32 = arith.constant 0 : i32
    %c0_i32_0 = arith.constant 0 : i32
    %c0_i32_1 = arith.constant 0 : i32
    return %c0_i32, %c0_i32_0 : i32, i32
  }
  func.func @transform_2(%arg0: i32, %arg1: i32) -> (i32, i32, i32) {
    %c0_i32 = arith.constant 0 : i32
    %c0_i32_0 = arith.constant 0 : i32
    return %arg0, %c0_i32, %arg1 : i32, i32, i32
  }
  func.func @transform_3(%arg0: i32, %arg1: i32) -> (i32, i32, i32, i32) {
    %c0_i32 = arith.constant 0 : i32
    %c0_i32_0 = arith.constant 0 : i32
    %c0_i32_1 = arith.constant 0 : i32
    return %arg0, %arg1, %c0_i32, %c0_i32_0 : i32, i32, i32, i32
  }
  func.func @transform_4(%arg0: i32, %arg1: i32) -> (i32, i32, i32, i32) {
    %c0_i32 = arith.constant 0 : i32
    %c0_i32_0 = arith.constant 0 : i32
    %c0_i32_1 = arith.constant 0 : i32
    return %arg0, %arg1, %c0_i32, %c0_i32_0 : i32, i32, i32, i32
  }
}

module attributes {stable_mosaic.version = 11 : i64} {
  func.func @bn_softmax_kernel(%arg0: i32, %arg1: i32, %arg2: memref<1x18x256xbf16, #tpu.memory_space<vmem>>, %arg3: memref<18x2xf32, #tpu.memory_space<vmem>>, %arg4: memref<1x18x256xbf16, #tpu.memory_space<vmem>>) attributes {dimension_semantics = [#tpu.dimension_semantics<parallel>, #tpu.dimension_semantics<parallel>], iteration_bounds = array<i64: 2, 1>, scalar_prefetch = 0 : i64, scratch_operands = 0 : i64, tpu.core_type = #tpu.core_type<tc>, window_params = [{transform_indices = @transform_0, window_bounds = array<i64: 1, 18, 256>}, {pipeline_mode = #tpu.pipeline_mode<synchronous>, transform_indices = @transform_1, window_bounds = array<i64: 18, 2>}, {transform_indices = @transform_2, window_bounds = array<i64: 1, 18, 256>}]} {
    %c0 = arith.constant 0 : index
    %c0_0 = arith.constant 0 : index
    %c0_1 = arith.constant 0 : index
    %0 = vector.load %arg2[%c0, %c0_0, %c0_1] : memref<1x18x256xbf16, #tpu.memory_space<vmem>>, vector<1x18x256xbf16>
    %1 = vector.shape_cast %0 : vector<1x18x256xbf16> to vector<18x256xbf16>
    %2 = arith.extf %1 : vector<18x256xbf16> to vector<18x256xf32>
    %c0_2 = arith.constant 0 : index
    %c0_3 = arith.constant 0 : index
    %3 = vector.load %arg3[%c0_2, %c0_3] : memref<18x2xf32, #tpu.memory_space<vmem>>, vector<18x1xf32>
    %4 = vector.broadcast %3 : vector<18x1xf32> to vector<18x256xf32>
    %5 = arith.mulf %2, %4 : vector<18x256xf32>
    %c0_4 = arith.constant 0 : index
    %c1 = arith.constant 1 : index
    %6 = vector.load %arg3[%c0_4, %c1] : memref<18x2xf32, #tpu.memory_space<vmem>>, vector<18x1xf32>
    %7 = vector.broadcast %6 : vector<18x1xf32> to vector<18x256xf32>
    %8 = arith.addf %5, %7 : vector<18x256xf32>
    %cst = arith.constant dense<0xFF800000> : vector<256xf32>
    %9 = vector.multi_reduction <maximumf>, %8, %cst [0] : vector<18x256xf32> to vector<256xf32>
    %10 = vector.shape_cast %9 : vector<256xf32> to vector<1x256xf32>
    %11 = vector.broadcast %10 : vector<1x256xf32> to vector<18x256xf32>
    %12 = arith.subf %8, %11 : vector<18x256xf32>
    %13 = math.exp %12 : vector<18x256xf32>
    %cst_5 = arith.constant dense<0.000000e+00> : vector<256xf32>
    %14 = vector.multi_reduction <add>, %13, %cst_5 [0] : vector<18x256xf32> to vector<256xf32>
    %15 = vector.shape_cast %14 : vector<256xf32> to vector<1x256xf32>
    %16 = tpu.reciprocal %15 {approx = true} : vector<1x256xf32> -> vector<1x256xf32>
    %17 = vector.broadcast %16 : vector<1x256xf32> to vector<18x256xf32>
    %18 = arith.mulf %13, %17 : vector<18x256xf32>
    %19 = arith.truncf %18 : vector<18x256xf32> to vector<18x256xbf16>
    %c0_6 = arith.constant 0 : index
    %c0_7 = arith.constant 0 : index
    %c0_8 = arith.constant 0 : index
    %20 = vector.load %arg4[%c0_6, %c0_7, %c0_8] : memref<1x18x256xbf16, #tpu.memory_space<vmem>>, vector<1x18x256xbf16>
    %21 = vector.shape_cast %20 : vector<1x18x256xbf16> to vector<18x256xbf16>
    %22 = vector.shape_cast %19 : vector<18x256xbf16> to vector<1x18x256xbf16>
    tpu.vector_store %arg4[%c0_6, %c0_7, %c0_8], %22 {strides = array<i32>} : memref<1x18x256xbf16, #tpu.memory_space<vmem>>, vector<1x18x256xbf16>,
    return
  }
  func.func @transform_0(%arg0: i32, %arg1: i32) -> (i32, i32, i32) {
    %c0_i32 = arith.constant 0 : i32
    %c0_i32_0 = arith.constant 0 : i32
    return %arg0, %c0_i32, %arg1 : i32, i32, i32
  }
  func.func @transform_1(%arg0: i32, %arg1: i32) -> (i32, i32) {
    %c0_i32 = arith.constant 0 : i32
    %c0_i32_0 = arith.constant 0 : i32
    %c0_i32_1 = arith.constant 0 : i32
    return %c0_i32, %c0_i32_0 : i32, i32
  }
  func.func @transform_2(%arg0: i32, %arg1: i32) -> (i32, i32, i32) {
    %c0_i32 = arith.constant 0 : i32
    %c0_i32_0 = arith.constant 0 : i32
    return %arg0, %c0_i32, %arg1 : i32, i32, i32
  }
}

</mosaic_0001>

<llo_original>
// kernel: downsample_pasa_group_softmax.3
$region0: #{downsample_pasa_group_softmax.3}
  #allocation0 [shape = 'u32[]', space=smem, size = 0x4, offset = 0x4, fixed_abs, tag = 'smem constant byte address 0x4 - core index']
  #allocation1 [shape = 'u32[72,128]{1,0:T(1,128)}', space=vmem, size = 0x9000, scoped, tag = 'internal scratch']
  %s0 = inlined_call_operand.vmem [shape: bf16[2,18,256], index: 0, kind: input, shape index: {}]
  %s1 = inlined_call_operand.vmem [shape: f32[18,2], index: 1, kind: input, shape index: {}]
  %s2 = inlined_call_operand.vmem [shape: bf16[2,18,256], index: 2, kind: output, shape index: {}]
  %s3 = sld [smem:[#allocation0]]
  $region41: #{downsample_pasa_group_softmax.3} parent=0
    _
  %s5 = ssub.s32 1, %s3
  %s6 = scalar_select 0, %s5, %s3
  loop: start=0, step=1, limit=4
  $region2: #{downsample_pasa_group_softmax.3} parent=0 // loop_pre_header
    _
  $region3: #{downsample_pasa_group_softmax.3} parent=0 // loop_header
    %s8 = sphi 0, %s12
    %p9 = scmp.ge.s32.totalorder %s8, 4
    %s15 = sphi 0, %s27
    %s16 = sphi 0, %s23
    %s17 = sphi 0, %s15
    %s18 = sphi 0, %s16
    %s19 = sphi 0, %s17
    %s20 = sphi 0, %s18
    %s32 = sphi 0, %s34
    %s35 = sphi 0, %s32
    %s36 = sphi 0, %s35
    %s52 = sphi 0, %s36
    %s56 = sphi 0, %s56
    %s58 = sphi 0, %s56
    %s59 = sphi 0, %s58
    %s73 = sphi 0, %s59
    %s81 = sphi 0, %s83
    %s84 = sphi 0, %s81
    %s85 = sphi 0, %s84
    %s101 = sphi 0, %s85
  $region4: #{downsample_pasa_group_softmax.3} parent=0 // loop_header_branch
    %11 = sbr.rel (%p9) target = $region8
  $region5: #{downsample_pasa_group_softmax.3} parent=0 // loop_body
    %s13 = ssub.s32 %s8, 1
    %s14 = ssub.s32 %s8, 2
    %s21 = sadd.s32 1, %s16
    %p22 = scmp.ge.s32.totalorder %s21, 1
    %s23 = scalar_select %p22, 0, %s21
    %s24 = sadd.s32 1, %s15
    %s25 = scalar_select %p22, %s24, %s15
    %p26 = scmp.ge.s32.totalorder %s25, 2
    %s27 = scalar_select %p26, 0, %s25
    %s28 = ssub.s32 %s15, %s27
    %s29 = ssub.s32 %s16, %s23
    %s30 = sor.u32 %s28, %s29
    %p31 = scmp.eq.s32.totalorder %s30, 0
    %s33 = sadd.s32 %s32, 1
    %s34 = scalar_select %p31, %s32, %s33
    %p37 = pneg %p31
    %p38 = scmp.eq.s32.totalorder %s8, 1
    %p39 = por %p37, %p38
    %p40 = scmp.ne.s32.totalorder %s32, %s35
    %p41 = scmp.eq.s32.totalorder %s8, 0
    %p42 = por %p40, %p41
    %p43 = scmp.ne.s32.totalorder %s32, %s35
    %p44 = scmp.eq.s32.totalorder %s13, 1
    %p45 = por %p43, %p44
    %p46 = scmp.ne.s32.totalorder %s35, %s36
    %p47 = scmp.eq.s32.totalorder %s13, 0
    %p48 = por %p46, %p47
    %p49 = scmp.ne.s32.totalorder %s35, %s36
    %p50 = scmp.eq.s32.totalorder %s14, 1
    %p51 = por %p49, %p50
    %p53 = scmp.ne.s32.totalorder %s36, %s52
    %p54 = scmp.eq.s32.totalorder %s14, 0
    %p55 = por %p53, %p54
    %s57 = sadd.s32 %s56, 1
    %p60 = scmp.eq.s32.totalorder %s8, 1
    %p61 = scmp.ne.s32.totalorder %s56, %s58
    %p62 = scmp.eq.s32.totalorder %s8, 0
    %p63 = por %p61, %p62
    %p64 = scmp.ne.s32.totalorder %s56, %s58
    %p65 = scmp.eq.s32.totalorder %s13, 1
    %p66 = por %p64, %p65
    %p67 = scmp.ne.s32.totalorder %s58, %s59
    %p68 = scmp.eq.s32.totalorder %s13, 0
    %p69 = por %p67, %p68
    %p70 = scmp.ne.s32.totalorder %s58, %s59
    %p71 = scmp.eq.s32.totalorder %s14, 1
    %p72 = por %p70, %p71
    %p74 = scmp.ne.s32.totalorder %s59, %s73
    %p75 = scmp.eq.s32.totalorder %s14, 0
    %p76 = por %p74, %p75
    %s77 = ssub.s32 %s15, %s27
    %s78 = ssub.s32 %s16, %s23
    %s79 = sor.u32 %s77, %s78
    %p80 = scmp.eq.s32.totalorder %s79, 0
    %s82 = sadd.s32 %s81, 1
    %s83 = scalar_select %p80, %s81, %s82
    %p86 = pneg %p80
    %p87 = scmp.eq.s32.totalorder %s8, 1
    %p88 = por %p86, %p87
    %p89 = scmp.ne.s32.totalorder %s81, %s84
    %p90 = scmp.eq.s32.totalorder %s8, 0
    %p91 = por %p89, %p90
    %p92 = scmp.ne.s32.totalorder %s81, %s84
    %p93 = scmp.eq.s32.totalorder %s13, 1
    %p94 = por %p92, %p93
    %p95 = scmp.ne.s32.totalorder %s84, %s85
    %p96 = scmp.eq.s32.totalorder %s13, 0
    %p97 = por %p95, %p96
    %p98 = scmp.ne.s32.totalorder %s84, %s85
    %p99 = scmp.eq.s32.totalorder %s14, 1
    %p100 = por %p98, %p99
    %p102 = scmp.ne.s32.totalorder %s85, %s101
    %p103 = scmp.eq.s32.totalorder %s14, 0
    %p104 = por %p102, %p103
    %p105 = scmp.le.s32.totalorder 1, %s8
    %p106 = scmp.lt.s32.totalorder %s8, 3
    %p107 = pnand %p105, %p106
    %p108 = pneg %p107
    // Predicated region
    $region9: #{downsample_pasa_group_softmax.3} parent=5 // pred_check
      _
    $region10: #{downsample_pasa_group_softmax.3} parent=5 // pred_check_branch
      %110 = sbr.rel (%p107) target = $region12
    $region11: #{downsample_pasa_group_softmax.3} parent=5 // pred_region
      %s111 = ssub.s32 %s8, 1
      // Predicated region
      $region13: #{downsample_pasa_group_softmax.3} parent=11 // pred_check
        %p112 = pneg %p69
      $region14: #{downsample_pasa_group_softmax.3} parent=11 // pred_check_branch
        %114 = sbr.rel (%p112) target = $region16
      $region15: #{downsample_pasa_group_softmax.3} parent=11 // pred_region
        _
      $region16: #{downsample_pasa_group_softmax.3} parent=11 // pred_fallthru
        _
    $region12: #{downsample_pasa_group_softmax.3} parent=5 // pred_fallthru
      _
    %p115 = scmp.lt.s32.totalorder %s8, 2
    // Predicated region
    $region17: #{downsample_pasa_group_softmax.3} parent=5 // pred_check
      %p116 = pneg %p115
    $region18: #{downsample_pasa_group_softmax.3} parent=5 // pred_check_branch
      %118 = sbr.rel (%p116) target = $region20
    $region19: #{downsample_pasa_group_softmax.3} parent=5 // pred_region
      // Predicated region
      $region21: #{downsample_pasa_group_softmax.3} parent=19 // pred_check
        %p119 = pneg %p42
      $region22: #{downsample_pasa_group_softmax.3} parent=19 // pred_check_branch
        %121 = sbr.rel (%p119) target = $region24
      $region23: #{downsample_pasa_group_softmax.3} parent=19 // pred_region
        %s122 = smul.u32 2, %s16
        %p123 = scmp.lt.s32.totalorder %s15, 1
        %s124 = scalar_select %p123, %s15, 1
        %p125 = scmp.lt.s32.totalorder %s122, 1
        %s126 = scalar_select %p125, %s122, 1
        %s127 = smul.addr %s124, 6
        %s128 = sadd.s32 %s126, %s127
        %s129 = smul.addr %s128, 4
        %s130 = scalar_lea.vmem %s0, %s129
        %s131 = smul.u32 2, %s16
      $region24: #{downsample_pasa_group_softmax.3} parent=19 // pred_fallthru
        _
    $region20: #{downsample_pasa_group_softmax.3} parent=5 // pred_fallthru
      _
    %p132 = scmp.le.s32.totalorder 1, %s8
    %p133 = scmp.lt.s32.totalorder %s8, 3
    %p134 = pnand %p132, %p133
    %p135 = pneg %p134
    // Predicated region
    $region25: #{downsample_pasa_group_softmax.3} parent=5 // pred_check
      _
    $region26: #{downsample_pasa_group_softmax.3} parent=5 // pred_check_branch
      %137 = sbr.rel (%p134) target = $region28
    $region27: #{downsample_pasa_group_softmax.3} parent=5 // pred_region
      %s138 = ssub.s32 %s8, 1
      %s139 = smul.u32 2, %s18
      %p140 = scmp.lt.s32.totalorder %s17, 1
      %s141 = scalar_select %p140, %s17, 1
      %p142 = scmp.lt.s32.totalorder %s139, 1
      %s143 = scalar_select %p142, %s139, 1
      %s144 = smul.addr %s141, 6
      %s145 = sadd.s32 %s143, %s144
      %s146 = smul.addr %s145, 4
      %s147 = scalar_lea.vmem %s0, %s146
      %p148 = pneg %p48
      %p149 = pneg %p45
      %p150 = pneg %p69
      %p151 = pneg %p66
      %p152 = pneg %p97
      %p153 = pneg %p94
      %s154 = smul.u32 2, %s18
      %p155 = scmp.lt.s32.totalorder %s17, 1
      %s156 = scalar_select %p155, %s17, 1
      %p157 = scmp.lt.s32.totalorder %s154, 1
      %s158 = scalar_select %p157, %s154, 1
      %s159 = smul.addr %s156, 6
      %s160 = sadd.s32 %s158, %s159
      %s161 = smul.addr %s160, 4
      %s162 = scalar_lea.vmem %s2, %s161
      %s163 = smul.u32 2, %s18
      %p164 = scmp.lt.s32.totalorder %s17, 1
      %s165 = scalar_select %p164, %s17, 1
      %p166 = scmp.lt.s32.totalorder %s163, 1
      %s167 = scalar_select %p166, %s163, 1
      %s168 = smul.addr %s165, 6
      %s169 = sadd.s32 %s167, %s168
      %s170 = smul.addr %s169, 4
      %s171 = scalar_lea.vmem %s0, %s170
      %s172 = smul.u32 2, %s18
      %s173 = smul.u32 2, %s18
      %p174 = scmp.lt.s32.totalorder %s17, 1
      %s175 = scalar_select %p174, %s17, 1
      %p176 = scmp.lt.s32.totalorder %s173, 1
      %s177 = scalar_select %p176, %s173, 1
      %s178 = smul.addr %s175, 6
      %s179 = sadd.s32 %s177, %s178
      %s180 = smul.addr %s179, 4
      %s181 = scalar_lea.vmem %s2, %s180
      %s182 = smul.u32 2, %s18
      %v183 = vld [vmem:[%s171] sm:$0xff]
      %v184 = vld [vmem:[%s171 + $0x8] sm:$0xff]
      %v185 = vld [vmem:[%s171 + $0x10] sm:$0x11]
      %v186 = vunpack.c.l.bf16 %v183
      %v187 = vunpack.c.h.bf16 %v183
      %v188 = vunpack.c.l.bf16 %v184
      %v189 = vunpack.c.h.bf16 %v184
      %v190 = vunpack.c.l.bf16 %v185
      %v191 = vunpack.c.h.bf16 %v185
      %v192 = vld [vmem:[%s1] sm:$0xff]
      %v193 = vld [vmem:[%s1 + $0x8] sm:$0xff]
      %v194 = vld [vmem:[%s1 + $0x10] sm:$0x3]
      %196 = vset.pattern.permute.xlu0 0
      %197 = vperm.xlu0 %196, %v192
      %v198 = vpop.permute.xlu0 %197
      %201 = vset.pattern.permute.xlu0 0
      %202 = vperm.xlu0 %201, %v193
      %v203 = vpop.permute.xlu0 %202
      %206 = vset.pattern.permute.xlu0 0
      %207 = vperm.xlu0 %206, %v194
      %v208 = vpop.permute.xlu0 %207
      %v210 = vmul.f32 %v186, %v198
      %v211 = vmul.f32 %v187, %v198
      %v212 = vmul.f32 %v188, %v203
      %v213 = vmul.f32 %v189, %v203
      %v214 = vmul.f32 %v190, %v208
      %v215 = vmul.f32 %v191, %v208
      %216 = vset.pattern.permute.xlu0 1
      %217 = vperm.xlu0 %216, %v192
      %v218 = vpop.permute.xlu0 %217
      %220 = vset.pattern.permute.xlu0 1
      %221 = vperm.xlu0 %220, %v193
      %v222 = vpop.permute.xlu0 %221
      %224 = vset.pattern.permute.xlu0 1
      %225 = vperm.xlu0 %224, %v194
      %v226 = vpop.permute.xlu0 %225
      %v228 = vadd.f32 %v210, %v218
      %v229 = vadd.f32 %v211, %v218
      %v230 = vadd.f32 %v212, %v222
      %v231 = vadd.f32 %v213, %v222
      %v232 = vadd.f32 %v214, %v226
      %v233 = vadd.f32 %v215, %v226
      %vm234 = vcmask 1041408
      %v235 = vsel %vm234, %v232, -inf
      %v236 = vmax.f32 %v228, %v235
      %v237 = vmax.f32 %v236, %v230
      %v238 = vrot.slane %v237, 4
      %v239 = vmax.f32 %v237, %v238
      %v240 = vrot.slane %v239, 2
      %v241 = vmax.f32 %v239, %v240
      %v242 = vrot.slane %v241, 1
      %v243 = vmax.f32 %v241, %v242
      %v244 = vsel %vm234, %v233, -inf
      %v245 = vmax.f32 %v229, %v244
      %v246 = vmax.f32 %v245, %v231
      %v247 = vrot.slane %v246, 4
      %v248 = vmax.f32 %v246, %v247
      %v249 = vrot.slane %v248, 2
      %v250 = vmax.f32 %v248, %v249
      %v251 = vrot.slane %v250, 1
      %v252 = vmax.f32 %v250, %v251
      %v253 = vsub.f32 %v228, %v243
      %v254 = vsub.f32 %v229, %v252
      %v255 = vsub.f32 %v230, %v243
      %v256 = vsub.f32 %v231, %v252
      %v257 = vsub.f32 %v232, %v243
      %v258 = vsub.f32 %v233, %v252
      %v259 = vmul.f32 %v253, 1.442695
      %v260 = vpow.pop %v259
      %v261 = vmul.f32 %v254, 1.442695
      %v262 = vpow.pop %v261
      %v263 = vmul.f32 %v255, 1.442695
      %v264 = vpow.pop %v263
      %v265 = vmul.f32 %v256, 1.442695
      %v266 = vpow.pop %v265
      %v267 = vmul.f32 %v257, 1.442695
      %v268 = vpow.pop %v267
      %v269 = vmul.f32 %v258, 1.442695
      %v270 = vpow.pop %v269
      %v271 = vadd.f32 %v260, %v264
      %v272 = vsel %vm234, %v268, 0.0
      %v273 = vadd.f32 %v271, %v272
      %v274 = vrot.slane %v273, 4
      %v275 = vadd.f32 %v273, %v274
      %v276 = vrot.slane %v275, 2
      %v277 = vadd.f32 %v275, %v276
      %v278 = vrot.slane %v277, 1
      %v279 = vadd.f32 %v277, %v278
      %v280 = vadd.f32 %v262, %v266
      %v281 = vsel %vm234, %v270, 0.0
      %v282 = vadd.f32 %v280, %v281
      %v283 = vrot.slane %v282, 4
      %v284 = vadd.f32 %v282, %v283
      %v285 = vrot.slane %v284, 2
      %v286 = vadd.f32 %v284, %v285
      %v287 = vrot.slane %v286, 1
      %v288 = vadd.f32 %v286, %v287
      %v289 = vrcp.pop %v279
      %v290 = vrcp.pop %v288
      %v291 = vmul.f32 %v260, %v289
      %v292 = vmul.f32 %v262, %v290
      %v293 = vmul.f32 %v264, %v289
      %v294 = vmul.f32 %v266, %v290
      %v295 = vmul.f32 %v268, %v289
      %v296 = vmul.f32 %v270, %v290
      %v297 = vpack.c.bf16 %v292, %v291
      %v298 = vpack.c.bf16 %v294, %v293
      %v299 = vpack.c.bf16 %v296, %v295
      %300 = vst [vmem:[%s181] sm:$0xff] %v297
      %301 = vst [vmem:[%s181 + $0x8] sm:$0xff] %v298
      %302 = vst [vmem:[%s181 + $0x10] sm:$0x11] %v299
      %s303 = smul.u32 2, %s18
      %p304 = scmp.lt.s32.totalorder %s17, 1
      %s305 = scalar_select %p304, %s17, 1
      %p306 = scmp.lt.s32.totalorder %s303, 1
      %s307 = scalar_select %p306, %s303, 1
      %s308 = smul.addr %s305, 6
      %s309 = sadd.s32 %s307, %s308
      %s310 = smul.addr %s309, 4
      %s311 = scalar_lea.vmem %s2, %s310
      // Predicated region
      $region29: #{downsample_pasa_group_softmax.3} parent=27 // pred_check
        %p312 = pneg %p94
      $region30: #{downsample_pasa_group_softmax.3} parent=27 // pred_check_branch
        %314 = sbr.rel (%p312) target = $region32
      $region31: #{downsample_pasa_group_softmax.3} parent=27 // pred_region
        %s315 = smul.u32 2, %s18
      $region32: #{downsample_pasa_group_softmax.3} parent=27 // pred_fallthru
        _
    $region28: #{downsample_pasa_group_softmax.3} parent=5 // pred_fallthru
      _
    %p316 = scmp.le.s32.totalorder 2, %s8
    // Predicated region
    $region33: #{downsample_pasa_group_softmax.3} parent=5 // pred_check
      %p317 = pneg %p316
    $region34: #{downsample_pasa_group_softmax.3} parent=5 // pred_check_branch
      %319 = sbr.rel (%p317) target = $region36
    $region35: #{downsample_pasa_group_softmax.3} parent=5 // pred_region
      %s320 = ssub.s32 %s8, 2
      // Predicated region
      $region37: #{downsample_pasa_group_softmax.3} parent=35 // pred_check
        %p321 = pneg %p100
      $region38: #{downsample_pasa_group_softmax.3} parent=35 // pred_check_branch
        %323 = sbr.rel (%p321) target = $region40
      $region39: #{downsample_pasa_group_softmax.3} parent=35 // pred_region
        %s324 = smul.u32 2, %s20
        %p325 = scmp.lt.s32.totalorder %s19, 1
        %s326 = scalar_select %p325, %s19, 1
        %p327 = scmp.lt.s32.totalorder %s324, 1
        %s328 = scalar_select %p327, %s324, 1
        %s329 = smul.addr %s326, 6
        %s330 = sadd.s32 %s328, %s329
        %s331 = smul.addr %s330, 4
        %s332 = scalar_lea.vmem %s2, %s331
      $region40: #{downsample_pasa_group_softmax.3} parent=35 // pred_fallthru
        _
    $region36: #{downsample_pasa_group_softmax.3} parent=5 // pred_fallthru
      _
  $region6: #{downsample_pasa_group_softmax.3} parent=0 // loop_footer
    %s12 = sadd.s32 1, %s8
  $region7: #{downsample_pasa_group_softmax.3} parent=0 // loop_footer_branch
    %7 = sbr.rel target = $region3
  $region8: #{downsample_pasa_group_softmax.3} parent=0 // loop_exit
    _

// kernel: downsample_pasa_group_softmax.2
$region0: #{downsample_pasa_group_softmax.2}
  #allocation0 [shape = 'u32[]', space=smem, size = 0x4, offset = 0x4, fixed_abs, tag = 'smem constant byte address 0x4 - core index']
  #allocation1 [shape = 'u32[72,128]{1,0:T(1,128)}', space=vmem, size = 0x9000, scoped, tag = 'internal scratch']
  #allocation2 [shape = 'bf16[48,256]{1,0:T(8,128)(2,1)}', space=vmem, size = 0x6000, scoped, tag = 'scratch operand']
  %s0 = inlined_call_operand.vmem [shape: bf16[2,16,288], index: 0, kind: input, shape index: {}]
  %s1 = inlined_call_operand.vmem [shape: bf16[18,48], index: 1, kind: input, shape index: {}]
  %s2 = inlined_call_operand.vmem [shape: bf16[2,18,256], index: 2, kind: output, shape index: {0}]
  %s3 = inlined_call_operand.vmem [shape: f32[2,1,18,1], index: 3, kind: output, shape index: {1}]
  %s4 = inlined_call_operand.vmem [shape: f32[2,1,18,1], index: 4, kind: output, shape index: {2}]
  %5 = xla_tuple %s2, %s3, %s4
  %s6 = sld [smem:[#allocation0]]
  $region57: #{downsample_pasa_group_softmax.2} parent=0
    _
  %s8 = ssub.s32 1, %s6
  %s9 = scalar_select 0, %s8, %s6
  loop: start=0, step=1, limit=4
  $region2: #{downsample_pasa_group_softmax.2} parent=0 // loop_pre_header
    _
  $region3: #{downsample_pasa_group_softmax.2} parent=0 // loop_header
    %s11 = sphi 0, %s15
    %p12 = scmp.ge.s32.totalorder %s11, 4
    %s18 = sphi 0, %s30
    %s19 = sphi 0, %s26
    %s20 = sphi 0, %s18
    %s21 = sphi 0, %s19
    %s22 = sphi 0, %s20
    %s23 = sphi 0, %s21
    %s33 = sphi 0, %s35
    %s36 = sphi 0, %s33
    %s37 = sphi 0, %s36
    %s53 = sphi 0, %s37
    %s57 = sphi 0, %s57
    %s59 = sphi 0, %s57
    %s60 = sphi 0, %s59
    %s74 = sphi 0, %s60
    %s82 = sphi 0, %s84
    %s85 = sphi 0, %s82
    %s86 = sphi 0, %s85
    %s102 = sphi 0, %s86
    %s110 = sphi 0, %s112
    %s113 = sphi 0, %s110
    %s114 = sphi 0, %s113
    %s130 = sphi 0, %s114
    %s138 = sphi 0, %s140
    %s141 = sphi 0, %s138
    %s142 = sphi 0, %s141
    %s158 = sphi 0, %s142
  $region4: #{downsample_pasa_group_softmax.2} parent=0 // loop_header_branch
    %14 = sbr.rel (%p12) target = $region8
  $region5: #{downsample_pasa_group_softmax.2} parent=0 // loop_body
    %s16 = ssub.s32 %s11, 1
    %s17 = ssub.s32 %s11, 2
    %s24 = sadd.s32 1, %s19
    %p25 = scmp.ge.s32.totalorder %s24, 1
    %s26 = scalar_select %p25, 0, %s24
    %s27 = sadd.s32 1, %s18
    %s28 = scalar_select %p25, %s27, %s18
    %p29 = scmp.ge.s32.totalorder %s28, 2
    %s30 = scalar_select %p29, 0, %s28
    %s31 = ssub.s32 %s18, %s30
    %p32 = scmp.eq.s32.totalorder %s31, 0
    %s34 = sadd.s32 %s33, 1
    %s35 = scalar_select %p32, %s33, %s34
    %p38 = pneg %p32
    %p39 = scmp.eq.s32.totalorder %s11, 1
    %p40 = por %p38, %p39
    %p41 = scmp.ne.s32.totalorder %s33, %s36
    %p42 = scmp.eq.s32.totalorder %s11, 0
    %p43 = por %p41, %p42
    %p44 = scmp.ne.s32.totalorder %s33, %s36
    %p45 = scmp.eq.s32.totalorder %s16, 1
    %p46 = por %p44, %p45
    %p47 = scmp.ne.s32.totalorder %s36, %s37
    %p48 = scmp.eq.s32.totalorder %s16, 0
    %p49 = por %p47, %p48
    %p50 = scmp.ne.s32.totalorder %s36, %s37
    %p51 = scmp.eq.s32.totalorder %s17, 1
    %p52 = por %p50, %p51
    %p54 = scmp.ne.s32.totalorder %s37, %s53
    %p55 = scmp.eq.s32.totalorder %s17, 0
    %p56 = por %p54, %p55
    %s58 = sadd.s32 %s57, 1
    %p61 = scmp.eq.s32.totalorder %s11, 1
    %p62 = scmp.ne.s32.totalorder %s57, %s59
    %p63 = scmp.eq.s32.totalorder %s11, 0
    %p64 = por %p62, %p63
    %p65 = scmp.ne.s32.totalorder %s57, %s59
    %p66 = scmp.eq.s32.totalorder %s16, 1
    %p67 = por %p65, %p66
    %p68 = scmp.ne.s32.totalorder %s59, %s60
    %p69 = scmp.eq.s32.totalorder %s16, 0
    %p70 = por %p68, %p69
    %p71 = scmp.ne.s32.totalorder %s59, %s60
    %p72 = scmp.eq.s32.totalorder %s17, 1
    %p73 = por %p71, %p72
    %p75 = scmp.ne.s32.totalorder %s60, %s74
    %p76 = scmp.eq.s32.totalorder %s17, 0
    %p77 = por %p75, %p76
    %s78 = ssub.s32 %s18, %s30
    %s79 = ssub.s32 %s19, %s26
    %s80 = sor.u32 %s78, %s79
    %p81 = scmp.eq.s32.totalorder %s80, 0
    %s83 = sadd.s32 %s82, 1
    %s84 = scalar_select %p81, %s82, %s83
    %p87 = pneg %p81
    %p88 = scmp.eq.s32.totalorder %s11, 1
    %p89 = por %p87, %p88
    %p90 = scmp.ne.s32.totalorder %s82, %s85
    %p91 = scmp.eq.s32.totalorder %s11, 0
    %p92 = por %p90, %p91
    %p93 = scmp.ne.s32.totalorder %s82, %s85
    %p94 = scmp.eq.s32.totalorder %s16, 1
    %p95 = por %p93, %p94
    %p96 = scmp.ne.s32.totalorder %s85, %s86
    %p97 = scmp.eq.s32.totalorder %s16, 0
    %p98 = por %p96, %p97
    %p99 = scmp.ne.s32.totalorder %s85, %s86
    %p100 = scmp.eq.s32.totalorder %s17, 1
    %p101 = por %p99, %p100
    %p103 = scmp.ne.s32.totalorder %s86, %s102
    %p104 = scmp.eq.s32.totalorder %s17, 0
    %p105 = por %p103, %p104
    %s106 = ssub.s32 %s18, %s30
    %s107 = ssub.s32 %s19, %s26
    %s108 = sor.u32 %s106, %s107
    %p109 = scmp.eq.s32.totalorder %s108, 0
    %s111 = sadd.s32 %s110, 1
    %s112 = scalar_select %p109, %s110, %s111
    %p115 = pneg %p109
    %p116 = scmp.eq.s32.totalorder %s11, 1
    %p117 = por %p115, %p116
    %p118 = scmp.ne.s32.totalorder %s110, %s113
    %p119 = scmp.eq.s32.totalorder %s11, 0
    %p120 = por %p118, %p119
    %p121 = scmp.ne.s32.totalorder %s110, %s113
    %p122 = scmp.eq.s32.totalorder %s16, 1
    %p123 = por %p121, %p122
    %p124 = scmp.ne.s32.totalorder %s113, %s114
    %p125 = scmp.eq.s32.totalorder %s16, 0
    %p126 = por %p124, %p125
    %p127 = scmp.ne.s32.totalorder %s113, %s114
    %p128 = scmp.eq.s32.totalorder %s17, 1
    %p129 = por %p127, %p128
    %p131 = scmp.ne.s32.totalorder %s114, %s130
    %p132 = scmp.eq.s32.totalorder %s17, 0
    %p133 = por %p131, %p132
    %s134 = ssub.s32 %s18, %s30
    %s135 = ssub.s32 %s19, %s26
    %s136 = sor.u32 %s134, %s135
    %p137 = scmp.eq.s32.totalorder %s136, 0
    %s139 = sadd.s32 %s138, 1
    %s140 = scalar_select %p137, %s138, %s139
    %p143 = pneg %p137
    %p144 = scmp.eq.s32.totalorder %s11, 1
    %p145 = por %p143, %p144
    %p146 = scmp.ne.s32.totalorder %s138, %s141
    %p147 = scmp.eq.s32.totalorder %s11, 0
    %p148 = por %p146, %p147
    %p149 = scmp.ne.s32.totalorder %s138, %s141
    %p150 = scmp.eq.s32.totalorder %s16, 1
    %p151 = por %p149, %p150
    %p152 = scmp.ne.s32.totalorder %s141, %s142
    %p153 = scmp.eq.s32.totalorder %s16, 0
    %p154 = por %p152, %p153
    %p155 = scmp.ne.s32.totalorder %s141, %s142
    %p156 = scmp.eq.s32.totalorder %s17, 1
    %p157 = por %p155, %p156
    %p159 = scmp.ne.s32.totalorder %s142, %s158
    %p160 = scmp.eq.s32.totalorder %s17, 0
    %p161 = por %p159, %p160
    %p162 = scmp.le.s32.totalorder 1, %s11
    %p163 = scmp.lt.s32.totalorder %s11, 3
    %p164 = pnand %p162, %p163
    %p165 = pneg %p164
    // Predicated region
    $region9: #{downsample_pasa_group_softmax.2} parent=5 // pred_check
      _
    $region10: #{downsample_pasa_group_softmax.2} parent=5 // pred_check_branch
      %167 = sbr.rel (%p164) target = $region12
    $region11: #{downsample_pasa_group_softmax.2} parent=5 // pred_region
      %s168 = ssub.s32 %s11, 1
      // Predicated region
      $region13: #{downsample_pasa_group_softmax.2} parent=11 // pred_check
        %p169 = pneg %p70
      $region14: #{downsample_pasa_group_softmax.2} parent=11 // pred_check_branch
        %171 = sbr.rel (%p169) target = $region16
      $region15: #{downsample_pasa_group_softmax.2} parent=11 // pred_region
        _
      $region16: #{downsample_pasa_group_softmax.2} parent=11 // pred_fallthru
        _
    $region12: #{downsample_pasa_group_softmax.2} parent=5 // pred_fallthru
      _
    %p172 = scmp.lt.s32.totalorder %s11, 2
    // Predicated region
    $region17: #{downsample_pasa_group_softmax.2} parent=5 // pred_check
      %p173 = pneg %p172
    $region18: #{downsample_pasa_group_softmax.2} parent=5 // pred_check_branch
      %175 = sbr.rel (%p173) target = $region20
    $region19: #{downsample_pasa_group_softmax.2} parent=5 // pred_region
      // Predicated region
      $region21: #{downsample_pasa_group_softmax.2} parent=19 // pred_check
        %p176 = pneg %p43
      $region22: #{downsample_pasa_group_softmax.2} parent=19 // pred_check_branch
        %178 = sbr.rel (%p176) target = $region24
      $region23: #{downsample_pasa_group_softmax.2} parent=19 // pred_region
        %p179 = scmp.lt.s32.totalorder %s18, 1
        %s180 = scalar_select %p179, %s18, 1
        %s181 = smul.addr %s180, 6
        %s182 = smul.addr %s181, 4
        %s183 = scalar_lea.vmem %s0, %s182
      $region24: #{downsample_pasa_group_softmax.2} parent=19 // pred_fallthru
        _
    $region20: #{downsample_pasa_group_softmax.2} parent=5 // pred_fallthru
      _
    %p184 = scmp.le.s32.totalorder 1, %s11
    %p185 = scmp.lt.s32.totalorder %s11, 3
    %p186 = pnand %p184, %p185
    %p187 = pneg %p186
    // Predicated region
    $region25: #{downsample_pasa_group_softmax.2} parent=5 // pred_check
      _
    $region26: #{downsample_pasa_group_softmax.2} parent=5 // pred_check_branch
      %189 = sbr.rel (%p186) target = $region28
    $region27: #{downsample_pasa_group_softmax.2} parent=5 // pred_region
      %s190 = ssub.s32 %s11, 1
      %p191 = scmp.lt.s32.totalorder %s20, 1
      %s192 = scalar_select %p191, %s20, 1
      %s193 = smul.addr %s192, 6
      %s194 = smul.addr %s193, 4
      %s195 = scalar_lea.vmem %s0, %s194
      %p196 = pneg %p49
      %p197 = pneg %p46
      %p198 = pneg %p70
      %p199 = pneg %p67
      %p200 = pneg %p98
      %p201 = pneg %p95
      %s202 = smul.u32 2, %s21
      %p203 = scmp.lt.s32.totalorder %s20, 1
      %s204 = scalar_select %p203, %s20, 1
      %p205 = scmp.lt.s32.totalorder %s202, 1
      %s206 = scalar_select %p205, %s202, 1
      %s207 = smul.addr %s204, 6
      %s208 = sadd.s32 %s206, %s207
      %s209 = smul.addr %s208, 4
      %s210 = scalar_lea.vmem %s2, %s209
      %p211 = pneg %p126
      %p212 = pneg %p123
      %p213 = scmp.lt.s32.totalorder %s20, 1
      %s214 = scalar_select %p213, %s20, 1
      %p215 = scmp.lt.s32.totalorder %s21, 0
      %s216 = scalar_select %p215, %s21, 0
      %s217 = smul.addr %s216, 3
      %s218 = smul.addr %s214, 3
      %s219 = sadd.s32 %s217, %s218
      %s220 = smul.addr %s219, 8
      %s221 = scalar_lea.vmem %s3, %s220
      %p222 = pneg %p154
      %p223 = pneg %p151
      %p224 = scmp.lt.s32.totalorder %s20, 1
      %s225 = scalar_select %p224, %s20, 1
      %p226 = scmp.lt.s32.totalorder %s21, 0
      %s227 = scalar_select %p226, %s21, 0
      %s228 = smul.addr %s227, 3
      %s229 = smul.addr %s225, 3
      %s230 = sadd.s32 %s228, %s229
      %s231 = smul.addr %s230, 8
      %s232 = scalar_lea.vmem %s4, %s231
      %p233 = scmp.lt.s32.totalorder %s20, 1
      %s234 = scalar_select %p233, %s20, 1
      %s235 = smul.addr %s234, 6
      %s236 = smul.addr %s235, 4
      %s237 = scalar_lea.vmem %s0, %s236
      %s238 = smul.u32 2, %s21
      %p239 = scmp.lt.s32.totalorder %s20, 1
      %s240 = scalar_select %p239, %s20, 1
      %p241 = scmp.lt.s32.totalorder %s238, 1
      %s242 = scalar_select %p241, %s238, 1
      %s243 = smul.addr %s240, 6
      %s244 = sadd.s32 %s242, %s243
      %s245 = smul.addr %s244, 4
      %s246 = scalar_lea.vmem %s2, %s245
      %s247 = smul.u32 2, %s21
      %p248 = scmp.lt.s32.totalorder %s20, 1
      %s249 = scalar_select %p248, %s20, 1
      %p250 = scmp.lt.s32.totalorder %s21, 0
      %s251 = scalar_select %p250, %s21, 0
      %s252 = smul.addr %s251, 3
      %s253 = smul.addr %s249, 3
      %s254 = sadd.s32 %s252, %s253
      %s255 = smul.addr %s254, 8
      %s256 = scalar_lea.vmem %s3, %s255
      %p257 = scmp.lt.s32.totalorder %s20, 1
      %s258 = scalar_select %p257, %s20, 1
      %p259 = scmp.lt.s32.totalorder %s21, 0
      %s260 = scalar_select %p259, %s21, 0
      %s261 = smul.addr %s260, 3
      %s262 = smul.addr %s258, 3
      %s263 = sadd.s32 %s261, %s262
      %s264 = smul.addr %s263, 8
      %s265 = scalar_lea.vmem %s4, %s264
      %v267 = vld [vmem:[%s237] sm:$0xff]
      %v268 = vld [vmem:[%s237 + $0xc] sm:$0xff]
      %269 = vst [vmem:[#allocation2] sm:$0xff] %v267
      %270 = vst [vmem:[#allocation2 + $0x8] sm:$0xff] %v268
      %v271 = vld [vmem:[%s237] sm:$0xff]
      %v272 = vld [vmem:[%s237 + $0x8] sm:$0xf]
      %v273 = vld [vmem:[%s237 + $0xc] sm:$0xff]
      %v274 = vld [vmem:[%s237 + $0x14] sm:$0xf]
      %279 = vrot.lane.b32.xlu0 %v271, 112
      %v280 = vpop.permute.xlu0 %279
      %281 = vrot.lane.b32.xlu0 %v272, 112
      %v282 = vpop.permute.xlu0 %281
      %283 = vrot.lane.b32.xlu0 %v273, 112
      %v284 = vpop.permute.xlu0 %283
      %285 = vrot.lane.b32.xlu0 %v274, 112
      %v286 = vpop.permute.xlu0 %285
      %v287 = vrot.slane %v280, 4
      %v288 = vrot.slane %v282, 4
      %v289 = vrot.slane %v284, 4
      %v290 = vrot.slane %v286, 4
      %vm291 = vcmask 1043456
      %v292 = vsel %vm291, %v287, %v288
      %vm293 = vcmask 916480
      %v294 = vsel %vm293, %v280, %v292
      %v295 = vsel %vm291, %v289, %v290
      %v296 = vsel %vm293, %v284, %v295
      %299 = vst [vmem:[#allocation2 + $0x10] sm:$0xff] %v294
      %300 = vst [vmem:[#allocation2 + $0x18] sm:$0xff] %v296
      %v301 = vld [vmem:[%s237] sm:$0xff]
      %v302 = vld [vmem:[%s237 + $0x8] sm:$0xf]
      %v303 = vld [vmem:[%s237 + $0xc] sm:$0xff]
      %v304 = vld [vmem:[%s237 + $0x14] sm:$0xf]
      %309 = vrot.lane.b32.xlu0 %v301, 96
      %v310 = vpop.permute.xlu0 %309
      %311 = vrot.lane.b32.xlu0 %v302, 96
      %v312 = vpop.permute.xlu0 %311
      %313 = vrot.lane.b32.xlu0 %v303, 96
      %v314 = vpop.permute.xlu0 %313
      %315 = vrot.lane.b32.xlu0 %v304, 96
      %v316 = vpop.permute.xlu0 %315
      %v317 = vrot.slane %v310, 4
      %v318 = vrot.slane %v312, 4
      %v319 = vrot.slane %v314, 4
      %v320 = vrot.slane %v316, 4
      %v321 = vsel %vm291, %v317, %v318
      %vm322 = vcmask 785408
      %v323 = vsel %vm322, %v310, %v321
      %v324 = vsel %vm291, %v319, %v320
      %v325 = vsel %vm322, %v314, %v324
      %328 = vst [vmem:[#allocation2 + $0x20] sm:$0xff] %v323
      %329 = vst [vmem:[#allocation2 + $0x28] sm:$0xff] %v325
      %v330 = vld [vmem:[%s1] sm:$0xf]
      %v331 = vld [vmem:[%s1 + $0x4] sm:$0xf]
      %v332 = vld [vmem:[%s1 + $0x8] sm:$0x1]
      %v333 = vld [vmem:[#allocation2] sm:$0xff]
      %v334 = vld [vmem:[#allocation2 + $0x8] sm:$0xff]
      %v335 = vld [vmem:[#allocation2 + $0x10] sm:$0xff]
      %v336 = vld [vmem:[#allocation2 + $0x18] sm:$0xff]
      %v337 = vld [vmem:[#allocation2 + $0x20] sm:$0xff]
      %v338 = vld [vmem:[#allocation2 + $0x28] sm:$0xff]
      %v342 = vunpack.c.l.b16 %v330
      %v343 = vunpack.c.l.b16 %v331
      %v344 = vunpack.c.l.b16 %v332
      %v345 = vpack.c.b16 %v343, %v342
      %v346 = vpack.c.b16 %v344, %v344
      %v353 = vunpack.c.l.b16 %v333
      %v354 = vunpack.c.h.b16 %v333
      %v355 = vunpack.c.l.b16 %v334
      %v356 = vunpack.c.h.b16 %v334
      %v357 = vunpack.c.l.b16 %v335
      %v358 = vunpack.c.h.b16 %v335
      %v359 = vunpack.c.l.b16 %v336
      %v360 = vunpack.c.h.b16 %v336
      %v361 = vunpack.c.l.b16 %v337
      %v362 = vunpack.c.h.b16 %v337
      %v363 = vunpack.c.l.b16 %v338
      %v364 = vunpack.c.h.b16 %v338
      %v365 = vpack.c.b16 %v355, %v353
      %v366 = vpack.c.b16 %v356, %v354
      %v367 = vpack.c.b16 %v359, %v357
      %v368 = vpack.c.b16 %v360, %v358
      %v369 = vpack.c.b16 %v363, %v361
      %v370 = vpack.c.b16 %v364, %v362
      %vm377 = vcmask 392192
      %v379 = vsel %vm377, %v345, 0
      %v382 = vsel %vm377, %v346, 0
      %384 = vmatpush.bf16.msra.mxu0 0
      %385 = vmatpush.bf16.msra.mxu0 0
      %386 = vmatpush.bf16.msra.mxu0 0
      %387 = vmatpush.bf16.msra.mxu0 0
      %388 = vmatpush.bf16.msra.mxu0 0
      %389 = vmatpush.bf16.msra.mxu0 %v369
      %390 = vmatpush.bf16.msra.mxu0 %v367
      %391 = vmatpush.bf16.msra.mxu0 %v365
      %392 = vmatmul.bf16.gmra.mxu0 %v379
      %v393 = vpop.f32.mrf.mxu0
      %v394 = vadd.f32 0.0, %v393
      %v395 = vpop.f32.mrf.mxu0
      %v396 = vadd.f32 0.0, %v395
      %397 = vmatmul.bf16.gmra.mxu0 %v382
      %v398 = vpop.f32.mrf.mxu0
      %v399 = vadd.f32 0.0, %v398
      %v400 = vpop.f32.mrf.mxu0
      %401 = vdwg.mxu0
      %402 = vmatpush.bf16.msra.mxu0 0
      %403 = vmatpush.bf16.msra.mxu0 0
      %404 = vmatpush.bf16.msra.mxu0 0
      %405 = vmatpush.bf16.msra.mxu0 0
      %406 = vmatpush.bf16.msra.mxu0 0
      %407 = vmatpush.bf16.msra.mxu0 %v370
      %408 = vmatpush.bf16.msra.mxu0 %v368
      %409 = vmatpush.bf16.msra.mxu0 %v366
      %410 = vmatmul.bf16.gmra.mxu0 %v379
      %v411 = vpop.f32.mrf.mxu0
      %v412 = vadd.f32 0.0, %v411
      %v413 = vpop.f32.mrf.mxu0
      %v414 = vadd.f32 0.0, %v413
      %415 = vmatmul.bf16.gmra.mxu0 %v382
      %v416 = vpop.f32.mrf.mxu0
      %v417 = vadd.f32 0.0, %v416
      %v418 = vpop.f32.mrf.mxu0
      %419 = vdwg.mxu0
      %v420 = vpack.c.bf16 %v412, %v394
      %v421 = vpack.c.bf16 %v414, %v396
      %v422 = vpack.c.bf16 %v417, %v399
      %423 = vst [vmem:[%s246] sm:$0xff] %v420
      %424 = vst [vmem:[%s246 + $0x8] sm:$0xff] %v421
      %425 = vst [vmem:[%s246 + $0x10] sm:$0x11] %v422
      %v426 = vadd.f32 %v394, %v412
      %427 = vadd.xlane.f32.xlu0 %v426
      %v428 = vpop.xlane.xlu0 %427
      %v429 = vadd.f32 %v396, %v414
      %430 = vadd.xlane.f32.xlu0 %v429
      %v431 = vpop.xlane.xlu0 %430
      %vm432 = vcmask 1041408
      %v433 = vsel %vm432, %v399, 0.0
      %v434 = vsel %vm432, %v417, 0.0
      %v435 = vadd.f32 %v433, %v434
      %436 = vadd.xlane.f32.xlu0 %v435
      %v437 = vpop.xlane.xlu0 %436
      %vm438 = vcmask 7168
      %439 = vst.msk [vmem:[%s256] sm:$0xff] %vm438, %v428
      %440 = vst.msk [vmem:[%s256 + $0x8] sm:$0xff] %vm438, %v431
      %vm441 = vcmask 1024
      %442 = vst.msk [vmem:[%s256 + $0x10] sm:$0x3] %vm441, %v437
      %v443 = vmul.f32 %v394, %v394
      %v444 = vmul.f32 %v412, %v412
      %v445 = vmul.f32 %v396, %v396
      %v446 = vmul.f32 %v414, %v414
      %v447 = vmul.f32 %v399, %v399
      %v448 = vmul.f32 %v417, %v417
      %v449 = vadd.f32 %v443, %v444
      %450 = vadd.xlane.f32.xlu0 %v449
      %v451 = vpop.xlane.xlu0 %450
      %v452 = vadd.f32 %v445, %v446
      %453 = vadd.xlane.f32.xlu0 %v452
      %v454 = vpop.xlane.xlu0 %453
      %v455 = vsel %vm432, %v447, 0.0
      %v456 = vsel %vm432, %v448, 0.0
      %v457 = vadd.f32 %v455, %v456
      %458 = vadd.xlane.f32.xlu0 %v457
      %v459 = vpop.xlane.xlu0 %458
      %460 = vst.msk [vmem:[%s265] sm:$0xff] %vm438, %v451
      %461 = vst.msk [vmem:[%s265 + $0x8] sm:$0xff] %vm438, %v454
      %462 = vst.msk [vmem:[%s265 + $0x10] sm:$0x3] %vm441, %v459
      %s463 = smul.u32 2, %s21
      %p464 = scmp.lt.s32.totalorder %s20, 1
      %s465 = scalar_select %p464, %s20, 1
      %p466 = scmp.lt.s32.totalorder %s463, 1
      %s467 = scalar_select %p466, %s463, 1
      %s468 = smul.addr %s465, 6
      %s469 = sadd.s32 %s467, %s468
      %s470 = smul.addr %s469, 4
      %s471 = scalar_lea.vmem %s2, %s470
      %p472 = scmp.lt.s32.totalorder %s20, 1
      %s473 = scalar_select %p472, %s20, 1
      %p474 = scmp.lt.s32.totalorder %s21, 0
      %s475 = scalar_select %p474, %s21, 0
      %s476 = smul.addr %s475, 3
      %s477 = smul.addr %s473, 3
      %s478 = sadd.s32 %s476, %s477
      %s479 = smul.addr %s478, 8
      %s480 = scalar_lea.vmem %s3, %s479
      %p481 = scmp.lt.s32.totalorder %s20, 1
      %s482 = scalar_select %p481, %s20, 1
      %p483 = scmp.lt.s32.totalorder %s21, 0
      %s484 = scalar_select %p483, %s21, 0
      %s485 = smul.addr %s484, 3
      %s486 = smul.addr %s482, 3
      %s487 = sadd.s32 %s485, %s486
      %s488 = smul.addr %s487, 8
      %s489 = scalar_lea.vmem %s4, %s488
      // Predicated region
      $region29: #{downsample_pasa_group_softmax.2} parent=27 // pred_check
        %p490 = pneg %p95
      $region30: #{downsample_pasa_group_softmax.2} parent=27 // pred_check_branch
        %492 = sbr.rel (%p490) target = $region32
      $region31: #{downsample_pasa_group_softmax.2} parent=27 // pred_region
        %s493 = smul.u32 2, %s21
      $region32: #{downsample_pasa_group_softmax.2} parent=27 // pred_fallthru
        _
      // Predicated region
      $region33: #{downsample_pasa_group_softmax.2} parent=27 // pred_check
        %p494 = pneg %p123
      $region34: #{downsample_pasa_group_softmax.2} parent=27 // pred_check_branch
        %496 = sbr.rel (%p494) target = $region36
      $region35: #{downsample_pasa_group_softmax.2} parent=27 // pred_region
        _
      $region36: #{downsample_pasa_group_softmax.2} parent=27 // pred_fallthru
        _
      // Predicated region
      $region37: #{downsample_pasa_group_softmax.2} parent=27 // pred_check
        %p497 = pneg %p151
      $region38: #{downsample_pasa_group_softmax.2} parent=27 // pred_check_branch
        %499 = sbr.rel (%p497) target = $region40
      $region39: #{downsample_pasa_group_softmax.2} parent=27 // pred_region
        _
      $region40: #{downsample_pasa_group_softmax.2} parent=27 // pred_fallthru
        _
    $region28: #{downsample_pasa_group_softmax.2} parent=5 // pred_fallthru
      _
    %p500 = scmp.le.s32.totalorder 2, %s11
    // Predicated region
    $region41: #{downsample_pasa_group_softmax.2} parent=5 // pred_check
      %p501 = pneg %p500
    $region42: #{downsample_pasa_group_softmax.2} parent=5 // pred_check_branch
      %503 = sbr.rel (%p501) target = $region44
    $region43: #{downsample_pasa_group_softmax.2} parent=5 // pred_region
      %s504 = ssub.s32 %s11, 2
      // Predicated region
      $region45: #{downsample_pasa_group_softmax.2} parent=43 // pred_check
        %p505 = pneg %p101
      $region46: #{downsample_pasa_group_softmax.2} parent=43 // pred_check_branch
        %507 = sbr.rel (%p505) target = $region48
      $region47: #{downsample_pasa_group_softmax.2} parent=43 // pred_region
        %s508 = smul.u32 2, %s23
        %p509 = scmp.lt.s32.totalorder %s22, 1
        %s510 = scalar_select %p509, %s22, 1
        %p511 = scmp.lt.s32.totalorder %s508, 1
        %s512 = scalar_select %p511, %s508, 1
        %s513 = smul.addr %s510, 6
        %s514 = sadd.s32 %s512, %s513
        %s515 = smul.addr %s514, 4
        %s516 = scalar_lea.vmem %s2, %s515
      $region48: #{downsample_pasa_group_softmax.2} parent=43 // pred_fallthru
        _
      // Predicated region
      $region49: #{downsample_pasa_group_softmax.2} parent=43 // pred_check
        %p517 = pneg %p129
      $region50: #{downsample_pasa_group_softmax.2} parent=43 // pred_check_branch
        %519 = sbr.rel (%p517) target = $region52
      $region51: #{downsample_pasa_group_softmax.2} parent=43 // pred_region
        %p520 = scmp.lt.s32.totalorder %s22, 1
        %s521 = scalar_select %p520, %s22, 1
        %p522 = scmp.lt.s32.totalorder %s23, 0
        %s523 = scalar_select %p522, %s23, 0
        %s524 = smul.addr %s523, 3
        %s525 = smul.addr %s521, 3
        %s526 = sadd.s32 %s524, %s525
        %s527 = smul.addr %s526, 8
        %s528 = scalar_lea.vmem %s3, %s527
      $region52: #{downsample_pasa_group_softmax.2} parent=43 // pred_fallthru
        _
      // Predicated region
      $region53: #{downsample_pasa_group_softmax.2} parent=43 // pred_check
        %p529 = pneg %p157
      $region54: #{downsample_pasa_group_softmax.2} parent=43 // pred_check_branch
        %531 = sbr.rel (%p529) target = $region56
      $region55: #{downsample_pasa_group_softmax.2} parent=43 // pred_region
        %p532 = scmp.lt.s32.totalorder %s22, 1
        %s533 = scalar_select %p532, %s22, 1
        %p534 = scmp.lt.s32.totalorder %s23, 0
        %s535 = scalar_select %p534, %s23, 0
        %s536 = smul.addr %s535, 3
        %s537 = smul.addr %s533, 3
        %s538 = sadd.s32 %s536, %s537
        %s539 = smul.addr %s538, 8
        %s540 = scalar_lea.vmem %s4, %s539
      $region56: #{downsample_pasa_group_softmax.2} parent=43 // pred_fallthru
        _
    $region44: #{downsample_pasa_group_softmax.2} parent=5 // pred_fallthru
      _
  $region6: #{downsample_pasa_group_softmax.2} parent=0 // loop_footer
    %s15 = sadd.s32 1, %s11
  $region7: #{downsample_pasa_group_softmax.2} parent=0 // loop_footer_branch
    %10 = sbr.rel target = $region3
  $region8: #{downsample_pasa_group_softmax.2} parent=0 // loop_exit
    _

</llo_original>
